<compile_context>
chip_gen: v5e
topology: v5e:2x2
jax: 0.10.0
libtpu: 0.0.40
codegen_flags: <defaults>
</compile_context>

<pallas_src>
import functools

import jax
import jax.numpy as jnp
import numpy as np
from jax.experimental import pallas as pl
from jax.experimental.pallas import tpu as pltpu


def _round_up(v, m):
    return ((v + m - 1) // m) * m


def _experts_linear_kernel(x_ref, g_ref, w_ref, b_ref, o_ref, *, scale_x):
    e = pl.program_id(2)
    k = pl.program_id(3)

    # Accumulator init folds the bias in: sum_e g[:, e] * b[e, :] == gate @ b.
    @pl.when((e == 0) & (k == 0))
    def _():
        o_ref[...] = jnp.dot(g_ref[...], b_ref[...],
                             preferred_element_type=jnp.float32)

    # Gate column for expert e from the resident (tm, E) block:
    # lane-select + cross-lane reduce (VPU/XLU filler while HBM-bound).
    ids = jax.lax.broadcasted_iota(jnp.int32, g_ref.shape, dimension=1)
    g_e = jnp.sum(jnp.where(ids == e, g_ref[...], 0.0),
                  axis=1, keepdims=True)                       # (tm, 1)

    if scale_x:
        # Apply the gate on the narrower operand (tm*tk VPU mults).
        o_ref[...] += jnp.dot(g_e * x_ref[...], w_ref[...],
                              preferred_element_type=jnp.float32)
    else:
        o_ref[...] += g_e * jnp.dot(x_ref[...], w_ref[...],
                                    preferred_element_type=jnp.float32)


def _vmem_capacity_bytes():
    """Per-core VMEM; falls back to the smallest (v7x) if the query fails."""
    try:
        return int(pltpu.get_tpu_info().vmem_capacity_bytes)
    except Exception:
        return 64 * 1024 * 1024


def _pick_batch_tile(batch):
    """tm: multiple of 8; 128/256 for large B (fills MXU M, bounds VMEM)."""
    if batch >= 512:
        tm = 256
    elif batch > 128:
        tm = 128
    else:
        tm = max(8, _round_up(batch, 8))
    return tm, _round_up(batch, tm)


def _estimate_vmem(tm, tn, tk, experts):
    f32 = 4
    # double-buffered x, gate, bias, W tiles + output block (counted x2).
    return f32 * (2 * tm * tk + 2 * tm * experts + 2 * experts * tn
                  + 2 * tk * tn + 2 * tm * tn)


def _pick_tiles(tm, experts, d_in_pad, d_out_pad, vmem_budget):
    """Largest lane-dense (tn, tk) whose double-buffered slabs fit the budget.

    Prefers big tn (fewer steps, longer DMA rows, unmasked stores), then big tk.
    """
    tn_cands = [c for c in (2048, 1024, 512, 256, 128)
                if c <= d_out_pad and d_out_pad % c == 0]
    tk_cands = [c for c in (2048, 1024, 512, 256, 128)
                if c <= d_in_pad and d_in_pad % c == 0]
    for tn in tn_cands:
        for tk in tk_cands:
            if _estimate_vmem(tm, tn, tk, experts) <= vmem_budget:
                return tn, tk
    return tn_cands[-1], tk_cands[-1]


def experts_linear(x, gate, W, b):
    """x: (B, D_in) f32, gate: (B, E) f32, W: (E, D_in, D_out), b: (E, 1, D_out)."""
    B, D_in = x.shape
    E, _, D_out = W.shape

    # ---- pad to TPU-friendly shapes (zero padding is exact for this op) ----
    d_in_pad = _round_up(D_in, 128)
    d_out_pad = _round_up(D_out, 128)
    tm, b_pad = _pick_batch_tile(B)

    x_p = jnp.pad(x, ((0, b_pad - B), (0, d_in_pad - D_in)))
    g_p = jnp.pad(gate, ((0, b_pad - B), (0, 0)))
    w_p = jnp.pad(W, ((0, 0), (0, d_in_pad - D_in), (0, d_out_pad - D_out)))
    bias_p = jnp.pad(b.reshape(E, D_out), ((0, 0), (0, d_out_pad - D_out)))

    # ---- generation-aware tile / VMEM sizing ----
    vmem_cap = _vmem_capacity_bytes()
    tile_budget = int(0.75 * vmem_cap)
    tn, tk = _pick_tiles(tm, E, d_in_pad, d_out_pad, tile_budget)

    m_tiles = b_pad // tm
    n_tiles = d_out_pad // tn
    # v7x megacore: make sure the 'parallel' axes carry >=2 iterations if we can.
    if m_tiles == 1 and n_tiles == 1 and d_out_pad >= 256:
        tn = d_out_pad // 2 if (d_out_pad // 2) % 128 == 0 else 128
        n_tiles = d_out_pad // tn
    k_tiles = d_in_pad // tk

    scale_x = tk <= tn

    est = _estimate_vmem(tm, tn, tk, E)
    vmem_limit = min(int(0.80 * vmem_cap),
                     max(32 * 1024 * 1024, int(1.25 * est) + (2 << 20)))

    kernel = functools.partial(_experts_linear_kernel, scale_x=scale_x)

    out_p = pl.pallas_call(
        kernel,
        out_shape=jax.ShapeDtypeStruct((b_pad, d_out_pad), jnp.float32),
        grid_spec=pltpu.PrefetchScalarGridSpec(
            num_scalar_prefetch=0,
            # (batch tiles, out tiles) parallel; (expert, K) trailing reductions.
            grid=(m_tiles, n_tiles, E, k_tiles),
            in_specs=[
                # x tile (tm, tk)
                pl.BlockSpec((tm, tk), lambda m, n, e, k: (m, k)),
                # gate: lane-dense (tm, E) block, resident across (n, e, k)
                pl.BlockSpec((tm, E), lambda m, n, e, k: (m, 0)),
                # W[e] tile: expert axis squeezed, kernel sees (tk, tn)
                pl.BlockSpec((None, tk, tn), lambda m, n, e, k: (e, k, n)),
                # bias slab (E, tn): constant over (e, k) -> resident per (m, n)
                pl.BlockSpec((E, tn), lambda m, n, e, k: (0, n)),
            ],
            # output block resident across the (expert, K) reduction axes
            out_specs=pl.BlockSpec((tm, tn), lambda m, n, e, k: (m, n)),
        ),
        compiler_params=pltpu.CompilerParams(
            dimension_semantics=("parallel", "parallel", "arbitrary", "arbitrary"),
            vmem_limit_bytes=vmem_limit,
        ),
    )(x_p, g_p, w_p, bias_p)

    return out_p[:B, :D_out]


def init_params(key, experts, input_dim, output_dim):
    # Matches the module's init: U(-a, a), a = sqrt(6 / (input_dim*output_dim)); bias = 0.
    alpha_bound = float(np.sqrt(6.0 / (input_dim * output_dim)))
    W = jax.random.uniform(
        key, (experts, input_dim, output_dim),
        minval=-alpha_bound, maxval=alpha_bound, dtype=jnp.float32)
    b = jnp.zeros((experts, 1, output_dim), dtype=jnp.float32)
    return W, b


def reference(x, gate, W, b):
    # Plain-JAX reference mirroring the PyTorch loop.
    E = W.shape[0]
    y = jnp.zeros((x.shape[0], W.shape[2]), dtype=jnp.float32)
    for i in range(E):
        y = y + gate[:, i][:, None] * (x @ W[i] + b[i])
    return y


if __name__ == "__main__":
    experts, input_dim, output_dim, batch = 4, 32, 32, 8

    key = jax.random.PRNGKey(0)
    k_w, k_x, k_g = jax.random.split(key, 3)

    W, b = init_params(k_w, experts, input_dim, output_dim)
    x = jax.random.normal(k_x, (batch, input_dim), dtype=jnp.float32)
    gate = jax.nn.softmax(
        jax.random.normal(k_g, (batch, experts), dtype=jnp.float32), axis=-1)

    out = experts_linear(x, gate, W, b)
    out = jax.block_until_ready(out)

    ref = reference(x, gate, W, b)
    assert out.shape == (batch, output_dim)
    np.testing.assert_allclose(np.asarray(out), np.asarray(ref),
                               rtol=1e-5, atol=1e-5)
    print("KERNEL_OK")
</pallas_src>

<mosaic_0001>
module attributes {stable_mosaic.version = 11 : i64} {
  func.func @_experts_linear_kernel(%arg0: i32, %arg1: i32, %arg2: i32, %arg3: i32, %arg4: memref<8x128xf32, #tpu.memory_space<vmem>>, %arg5: memref<8x4xf32, #tpu.memory_space<vmem>>, %arg6: memref<1x128x128xf32, #tpu.memory_space<vmem>>, %arg7: memref<4x128xf32, #tpu.memory_space<vmem>>, %arg8: memref<8x128xf32, #tpu.memory_space<vmem>>) attributes {dimension_semantics = [#tpu.dimension_semantics<parallel>, #tpu.dimension_semantics<parallel>, #tpu.dimension_semantics<arbitrary>, #tpu.dimension_semantics<arbitrary>], iteration_bounds = array<i64: 1, 1, 4, 1>, scalar_prefetch = 0 : i64, scratch_operands = 0 : i64, tpu.core_type = #tpu.core_type<tc>, window_params = [{transform_indices = @transform_0, window_bounds = array<i64: 8, 128>}, {transform_indices = @transform_1, window_bounds = array<i64: 8, 4>}, {transform_indices = @transform_2, window_bounds = array<i64: 1, 128, 128>}, {transform_indices = @transform_3, window_bounds = array<i64: 4, 128>}, {transform_indices = @transform_4, window_bounds = array<i64: 8, 128>}]} {
    %c0_i32 = arith.constant 0 : i32
    %0 = arith.cmpi eq, %arg2, %c0_i32 : i32
    %c0_i32_0 = arith.constant 0 : i32
    %1 = arith.cmpi eq, %arg3, %c0_i32_0 : i32
    %2 = arith.andi %0, %1 : i1
    %3 = arith.extui %2 : i1 to i32
    %c0_i32_1 = arith.constant 0 : i32
    %4 = arith.cmpi ne, %3, %c0_i32_1 : i32
    scf.if %4 {
      %c0_14 = arith.constant 0 : index
      %c0_15 = arith.constant 0 : index
      %22 = vector.load %arg5[%c0_14, %c0_15] : memref<8x4xf32, #tpu.memory_space<vmem>>, vector<8x4xf32>
      %c0_16 = arith.constant 0 : index
      %c0_17 = arith.constant 0 : index
      %23 = vector.load %arg7[%c0_16, %c0_17] : memref<4x128xf32, #tpu.memory_space<vmem>>, vector<4x128xf32>
      %cst_18 = arith.constant dense<0.000000e+00> : vector<8x128xf32>
      %24 = tpu.matmul %22, %23, %cst_18 {dimension_numbers = #tpu.dot_dimension_numbers<[1], [0], [0], [1], [0, 0, 1, 1], [], []>} : vector<8x4xf32>, vector<4x128xf32>, vector<8x128xf32> -> vector<8x128xf32>
      %c0_19 = arith.constant 0 : index
      %c0_20 = arith.constant 0 : index
      %25 = vector.load %arg8[%c0_19, %c0_20] : memref<8x128xf32, #tpu.memory_space<vmem>>, vector<8x128xf32>
      tpu.vector_store %arg8[%c0_19, %c0_20], %24 {strides = array<i32>} : memref<8x128xf32, #tpu.memory_space<vmem>>, vector<8x128xf32>,
    } else {
    }
    %5 = tpu.iota {dimensions = array<i32: 1>} : vector<8x4xi32>
    %6 = vector.broadcast %arg2 : i32 to vector<8x4xi32>
    %7 = arith.cmpi eq, %5, %6 : vector<8x4xi32>
    %c0 = arith.constant 0 : index
    %c0_2 = arith.constant 0 : index
    %8 = vector.load %arg5[%c0, %c0_2] : memref<8x4xf32, #tpu.memory_space<vmem>>, vector<8x4xf32>
    %cst = arith.constant 0.000000e+00 : f32
    %9 = vector.broadcast %cst : f32 to vector<8x4xf32>
    %10 = arith.select %7, %8, %9 : vector<8x4xi1>, vector<8x4xf32>
    %cst_3 = arith.constant dense<0.000000e+00> : vector<8xf32>
    %11 = vector.multi_reduction <add>, %10, %cst_3 [1] : vector<8x4xf32> to vector<8xf32>
    %12 = vector.shape_cast %11 : vector<8xf32> to vector<8x1xf32>
    %c0_4 = arith.constant 0 : index
    %c0_5 = arith.constant 0 : index
    %13 = vector.load %arg8[%c0_4, %c0_5] : memref<8x128xf32, #tpu.memory_space<vmem>>, vector<8x128xf32>
    %c0_6 = arith.constant 0 : index
    %c0_7 = arith.constant 0 : index
    %14 = vector.load %arg4[%c0_6, %c0_7] : memref<8x128xf32, #tpu.memory_space<vmem>>, vector<8x128xf32>
    %15 = vector.broadcast %12 : vector<8x1xf32> to vector<8x128xf32>
    %16 = arith.mulf %15, %14 : vector<8x128xf32>
    %c0_8 = arith.constant 0 : index
    %c0_9 = arith.constant 0 : index
    %c0_10 = arith.constant 0 : index
    %17 = vector.load %arg6[%c0_8, %c0_9, %c0_10] : memref<1x128x128xf32, #tpu.memory_space<vmem>>, vector<1x128x128xf32>
    %18 = vector.shape_cast %17 : vector<1x128x128xf32> to vector<128x128xf32>
    %cst_11 = arith.constant dense<0.000000e+00> : vector<8x128xf32>
    %19 = tpu.matmul %16, %18, %cst_11 {dimension_numbers = #tpu.dot_dimension_numbers<[1], [0], [0], [1], [0, 0, 1, 1], [], []>} : vector<8x128xf32>, vector<128x128xf32>, vector<8x128xf32> -> vector<8x128xf32>
    %20 = arith.addf %13, %19 : vector<8x128xf32>
    %c0_12 = arith.constant 0 : index
    %c0_13 = arith.constant 0 : index
    %21 = vector.load %arg8[%c0_12, %c0_13] : memref<8x128xf32, #tpu.memory_space<vmem>>, vector<8x128xf32>
    tpu.vector_store %arg8[%c0_12, %c0_13], %20 {strides = array<i32>} : memref<8x128xf32, #tpu.memory_space<vmem>>, vector<8x128xf32>,
    return
  }
  func.func @transform_0(%arg0: i32, %arg1: i32, %arg2: i32, %arg3: i32) -> (i32, i32) {
    %c0_i32 = arith.constant 0 : i32
    return %arg0, %arg3 : i32, i32
  }
  func.func @transform_1(%arg0: i32, %arg1: i32, %arg2: i32, %arg3: i32) -> (i32, i32) {
    %c0_i32 = arith.constant 0 : i32
    %c0_i32_0 = arith.constant 0 : i32
    return %arg0, %c0_i32 : i32, i32
  }
  func.func @transform_2(%arg0: i32, %arg1: i32, %arg2: i32, %arg3: i32) -> (i32, i32, i32) {
    %c0_i32 = arith.constant 0 : i32
    return %arg2, %arg3, %arg1 : i32, i32, i32
  }
  func.func @transform_3(%arg0: i32, %arg1: i32, %arg2: i32, %arg3: i32) -> (i32, i32) {
    %c0_i32 = arith.constant 0 : i32
    %c0_i32_0 = arith.constant 0 : i32
    return %c0_i32, %arg1 : i32, i32
  }
  func.func @transform_4(%arg0: i32, %arg1: i32, %arg2: i32, %arg3: i32) -> (i32, i32) {
    %c0_i32 = arith.constant 0 : i32
    return %arg0, %arg1 : i32, i32
  }
}

</mosaic_0001>

<llo_original>
// kernel: tpu_custom_call.1
$region0: #{tpu_custom_call.1}
  #allocation0 [shape = 'u32[]', space=smem, size = 0x4, offset = 0x4, fixed_abs, tag = 'smem constant byte address 0x4 - core index']
  #allocation1 [shape = 'u32[72,128]{1,0:T(1,128)}', space=vmem, size = 0x9000, scoped, tag = 'internal scratch']
  %s0 = inlined_call_operand.vmem [shape: f32[8,128], index: 0, kind: input, shape index: {}]
  %s1 = inlined_call_operand.vmem [shape: f32[8,4], index: 1, kind: input, shape index: {}]
  %s2 = inlined_call_operand.hbm [shape: f32[4,128,128], index: 2, kind: input, shape index: {}]
  %s3 = inlined_call_operand.vmem [shape: f32[4,128], index: 3, kind: input, shape index: {}]
  %s4 = inlined_call_operand.hbm [shape: f32[8,128], index: 4, kind: output, shape index: {}]
  %s5 = sld [smem:[#allocation0]]
  $region57: #{tpu_custom_call.1} parent=0
    _
  %s7 = ssub.s32 1, %s5
  %s8 = scalar_select 0, %s7, %s5
  $region1: #{tpu_custom_call.1} parent=0
    #allocation2 [shape = 'u8[131072]{0}', space=vmem, size = 0x20000, scoped, tag = 'input window, operand 2']
    #allocation3 [shape = 's32[2]{0}', space=sflag, size = 0x8, scoped, tag = 'scoped memory for tpu_custom_call.1']
    #allocation4 [shape = 's32[2]{0}', space=sflag, size = 0x8, scoped, tag = 'scoped memory for tpu_custom_call.1']
    #allocation5 [shape = 'u8[4096]{0}', space=vmem, size = 0x1000, scoped, tag = 'output window, operand 0, single buffered']
    %9 = vsyncpa [#allocation3], 0
    %s10 = scalar_lea.sflag [#allocation3], 1
    %11 = vsyncpa %s10, 0
    %12 = vsyncpa [#allocation4], 0
    loop: start=0, step=1, limit=6
    $region2: #{tpu_custom_call.1} parent=1 // loop_pre_header
      _
    $region3: #{tpu_custom_call.1} parent=1 // loop_header
      %s14 = sphi 0, %s18
      %p15 = scmp.ge.s32.totalorder %s14, 6
      %s21 = sphi 0, %s47
      %s22 = sphi 0, %s43
      %s23 = sphi 0, %s39
      %s24 = sphi 0, %s35
      %s25 = sphi 0, %s21
      %s26 = sphi 0, %s22
      %s27 = sphi 0, %s23
      %s28 = sphi 0, %s24
      %s29 = sphi 0, %s25
      %s30 = sphi 0, %s26
      %s31 = sphi 0, %s27
      %s32 = sphi 0, %s28
      %s52 = sphi 0, %s54
      %s55 = sphi 0, %s52
      %s56 = sphi 0, %s55
      %s72 = sphi 0, %s56
      %s78 = sphi 0, %s80
      %s81 = sphi 0, %s78
      %s82 = sphi 0, %s81
      %s98 = sphi 0, %s82
      %s108 = sphi 0, %s110
      %s111 = sphi 0, %s108
      %s112 = sphi 0, %s111
      %s128 = sphi 0, %s112
      %s134 = sphi 0, %s136
      %s137 = sphi 0, %s134
      %s138 = sphi 0, %s137
      %s154 = sphi 0, %s138
      %s162 = sphi 0, %s164
      %s165 = sphi 0, %s162
      %s166 = sphi 0, %s165
      %s182 = sphi 0, %s166
    $region4: #{tpu_custom_call.1} parent=1 // loop_header_branch
      %17 = sbr.rel (%p15) target = $region8
    $region5: #{tpu_custom_call.1} parent=1 // loop_body
      %s19 = ssub.s32 %s14, 1
      %s20 = ssub.s32 %s14, 2
      %s33 = sadd.s32 1, %s24
      %p34 = scmp.ge.s32.totalorder %s33, 1
      %s35 = scalar_select %p34, 0, %s33
      %s36 = sadd.s32 1, %s23
      %s37 = scalar_select %p34, %s36, %s23
      %p38 = scmp.ge.s32.totalorder %s37, 4
      %s39 = scalar_select %p38, 0, %s37
      %s40 = sadd.s32 1, %s22
      %s41 = scalar_select %p38, %s40, %s22
      %p42 = scmp.ge.s32.totalorder %s41, 1
      %s43 = scalar_select %p42, 0, %s41
      %s44 = sadd.s32 1, %s21
      %s45 = scalar_select %p42, %s44, %s21
      %p46 = scmp.ge.s32.totalorder %s45, 1
      %s47 = scalar_select %p46, 0, %s45
      %s48 = ssub.s32 %s21, %s47
      %s49 = ssub.s32 %s24, %s35
      %s50 = sor.u32 %s48, %s49
      %p51 = scmp.eq.s32.totalorder %s50, 0
      %s53 = sadd.s32 %s52, 1
      %s54 = scalar_select %p51, %s52, %s53
      %p57 = pneg %p51
      %p58 = scmp.eq.s32.totalorder %s14, 3
      %p59 = por %p57, %p58
      %p60 = scmp.ne.s32.totalorder %s52, %s55
      %p61 = scmp.eq.s32.totalorder %s14, 0
      %p62 = por %p60, %p61
      %p63 = scmp.ne.s32.totalorder %s52, %s55
      %p64 = scmp.eq.s32.totalorder %s19, 3
      %p65 = por %p63, %p64
      %p66 = scmp.ne.s32.totalorder %s55, %s56
      %p67 = scmp.eq.s32.totalorder %s19, 0
      %p68 = por %p66, %p67
      %p69 = scmp.ne.s32.totalorder %s55, %s56
      %p70 = scmp.eq.s32.totalorder %s20, 3
      %p71 = por %p69, %p70
      %p73 = scmp.ne.s32.totalorder %s56, %s72
      %p74 = scmp.eq.s32.totalorder %s20, 0
      %p75 = por %p73, %p74
      %s76 = ssub.s32 %s21, %s47
      %p77 = scmp.eq.s32.totalorder %s76, 0
      %s79 = sadd.s32 %s78, 1
      %s80 = scalar_select %p77, %s78, %s79
      %p83 = pneg %p77
      %p84 = scmp.eq.s32.totalorder %s14, 3
      %p85 = por %p83, %p84
      %p86 = scmp.ne.s32.totalorder %s78, %s81
      %p87 = scmp.eq.s32.totalorder %s14, 0
      %p88 = por %p86, %p87
      %p89 = scmp.ne.s32.totalorder %s78, %s81
      %p90 = scmp.eq.s32.totalorder %s19, 3
      %p91 = por %p89, %p90
      %p92 = scmp.ne.s32.totalorder %s81, %s82
      %p93 = scmp.eq.s32.totalorder %s19, 0
      %p94 = por %p92, %p93
      %p95 = scmp.ne.s32.totalorder %s81, %s82
      %p96 = scmp.eq.s32.totalorder %s20, 3
      %p97 = por %p95, %p96
      %p99 = scmp.ne.s32.totalorder %s82, %s98
      %p100 = scmp.eq.s32.totalorder %s20, 0
      %p101 = por %p99, %p100
      %s102 = ssub.s32 %s23, %s39
      %s103 = ssub.s32 %s24, %s35
      %s104 = sor.u32 %s102, %s103
      %s105 = ssub.s32 %s22, %s43
      %s106 = sor.u32 %s104, %s105
      %p107 = scmp.eq.s32.totalorder %s106, 0
      %s109 = sadd.s32 %s108, 1
      %s110 = scalar_select %p107, %s108, %s109
      %p113 = pneg %p107
      %p114 = scmp.eq.s32.totalorder %s14, 3
      %p115 = por %p113, %p114
      %p116 = scmp.ne.s32.totalorder %s108, %s111
      %p117 = scmp.eq.s32.totalorder %s14, 0
      %p118 = por %p116, %p117
      %p119 = scmp.ne.s32.totalorder %s108, %s111
      %p120 = scmp.eq.s32.totalorder %s19, 3
      %p121 = por %p119, %p120
      %p122 = scmp.ne.s32.totalorder %s111, %s112
      %p123 = scmp.eq.s32.totalorder %s19, 0
      %p124 = por %p122, %p123
      %p125 = scmp.ne.s32.totalorder %s111, %s112
      %p126 = scmp.eq.s32.totalorder %s20, 3
      %p127 = por %p125, %p126
      %p129 = scmp.ne.s32.totalorder %s112, %s128
      %p130 = scmp.eq.s32.totalorder %s20, 0
      %p131 = por %p129, %p130
      %s132 = ssub.s32 %s22, %s43
      %p133 = scmp.eq.s32.totalorder %s132, 0
      %s135 = sadd.s32 %s134, 1
      %s136 = scalar_select %p133, %s134, %s135
      %p139 = pneg %p133
      %p140 = scmp.eq.s32.totalorder %s14, 3
      %p141 = por %p139, %p140
      %p142 = scmp.ne.s32.totalorder %s134, %s137
      %p143 = scmp.eq.s32.totalorder %s14, 0
      %p144 = por %p142, %p143
      %p145 = scmp.ne.s32.totalorder %s134, %s137
      %p146 = scmp.eq.s32.totalorder %s19, 3
      %p147 = por %p145, %p146
      %p148 = scmp.ne.s32.totalorder %s137, %s138
      %p149 = scmp.eq.s32.totalorder %s19, 0
      %p150 = por %p148, %p149
      %p151 = scmp.ne.s32.totalorder %s137, %s138
      %p152 = scmp.eq.s32.totalorder %s20, 3
      %p153 = por %p151, %p152
      %p155 = scmp.ne.s32.totalorder %s138, %s154
      %p156 = scmp.eq.s32.totalorder %s20, 0
      %p157 = por %p155, %p156
      %s158 = ssub.s32 %s21, %s47
      %s159 = ssub.s32 %s22, %s43
      %s160 = sor.u32 %s158, %s159
      %p161 = scmp.eq.s32.totalorder %s160, 0
      %s163 = sadd.s32 %s162, 1
      %s164 = scalar_select %p161, %s162, %s163
      %p167 = pneg %p161
      %p168 = scmp.eq.s32.totalorder %s14, 3
      %p169 = por %p167, %p168
      %p170 = scmp.ne.s32.totalorder %s162, %s165
      %p171 = scmp.eq.s32.totalorder %s14, 0
      %p172 = por %p170, %p171
      %p173 = scmp.ne.s32.totalorder %s162, %s165
      %p174 = scmp.eq.s32.totalorder %s19, 3
      %p175 = por %p173, %p174
      %p176 = scmp.ne.s32.totalorder %s165, %s166
      %p177 = scmp.eq.s32.totalorder %s19, 0
      %p178 = por %p176, %p177
      %p179 = scmp.ne.s32.totalorder %s165, %s166
      %p180 = scmp.eq.s32.totalorder %s20, 3
      %p181 = por %p179, %p180
      %p183 = scmp.ne.s32.totalorder %s166, %s182
      %p184 = scmp.eq.s32.totalorder %s20, 0
      %p185 = por %p183, %p184
      %p186 = scmp.le.s32.totalorder 1, %s14
      %p187 = scmp.lt.s32.totalorder %s14, 5
      %p188 = pnand %p186, %p187
      %p189 = pneg %p188
      // Predicated region
      $region9: #{tpu_custom_call.1} parent=5 // pred_check
        _
      $region10: #{tpu_custom_call.1} parent=5 // pred_check_branch
        %191 = sbr.rel (%p188) target = $region12
      $region11: #{tpu_custom_call.1} parent=5 // pred_region
        %s192 = ssub.s32 %s14, 1
        // Predicated region
        $region13: #{tpu_custom_call.1} parent=11 // pred_check
          %p193 = pneg %p68
        $region14: #{tpu_custom_call.1} parent=11 // pred_check_branch
          %195 = sbr.rel (%p193) target = $region16
        $region15: #{tpu_custom_call.1} parent=11 // pred_region
          %p196 = scmp.lt.s32.totalorder %s25, 0
          %s197 = scalar_select %p196, %s25, 0
          %p198 = scmp.lt.s32.totalorder %s28, 0
          %s199 = scalar_select %p198, %s28, 0
          %s200 = sadd.s32 %s199, %s197
          %s201 = smul.addr %s200, 8
          %s202 = scalar_lea.vmem %s0, %s201
        $region16: #{tpu_custom_call.1} parent=11 // pred_fallthru
          _
        // Predicated region
        $region17: #{tpu_custom_call.1} parent=11 // pred_check
          %p203 = pneg %p94
        $region18: #{tpu_custom_call.1} parent=11 // pred_check_branch
          %205 = sbr.rel (%p203) target = $region20
        $region19: #{tpu_custom_call.1} parent=11 // pred_region
          %p206 = scmp.lt.s32.totalorder %s25, 0
          %s207 = scalar_select %p206, %s25, 0
          %s208 = smul.addr %s207, 8
          %s209 = scalar_lea.vmem %s1, %s208
        $region20: #{tpu_custom_call.1} parent=11 // pred_fallthru
          _
        // Predicated region
        $region21: #{tpu_custom_call.1} parent=11 // pred_check
          %p210 = pneg %p150
        $region22: #{tpu_custom_call.1} parent=11 // pred_check_branch
          %212 = sbr.rel (%p210) target = $region24
        $region23: #{tpu_custom_call.1} parent=11 // pred_region
          %p213 = scmp.lt.s32.totalorder %s26, 0
          %s214 = scalar_select %p213, %s26, 0
          %s215 = smul.addr %s214, 4
          %s216 = scalar_lea.vmem %s3, %s215
        $region24: #{tpu_custom_call.1} parent=11 // pred_fallthru
          _
      $region12: #{tpu_custom_call.1} parent=5 // pred_fallthru
        _
      %p217 = scmp.lt.s32.totalorder %s14, 4
      // Predicated region
      $region25: #{tpu_custom_call.1} parent=5 // pred_check
        %p218 = pneg %p217
      $region26: #{tpu_custom_call.1} parent=5 // pred_check_branch
        %220 = sbr.rel (%p218) target = $region28
      $region27: #{tpu_custom_call.1} parent=5 // pred_region
        // Predicated region
        $region29: #{tpu_custom_call.1} parent=27 // pred_check
          %p221 = pneg %p118
        $region30: #{tpu_custom_call.1} parent=27 // pred_check_branch
          %223 = sbr.rel (%p221) target = $region32
        $region31: #{tpu_custom_call.1} parent=27 // pred_region
          %s224 = sand.u32 %s108, 1
          %s225 = scalar_lea.sflag [#allocation3], %s224
          %s226 = sand.u32 %s108, 1
          %s227 = smul.addr %s226, 128
          %s228 = scalar_lea.vmem [#allocation2], %s227
          %s229 = smul.u32 16, %s24
          %231 = vsyncadd %s225, 0
          %s232 = sadd.s32 %s22, %s229
          %s233 = smul.addr %s23, 16
          %s234 = sadd.s32 %s232, %s233
          %s235 = smul.addr %s234, 8
          %s236 = scalar_lea.hbm %s2, %s235
          %s237 = sshll.u32 %s236, 4
          %s238 = int_to_ptr.hbm [resolvable:$true] %s237
          %s239 = sshll.u32 %s228, 4
          %s240 = int_to_ptr.vmem [resolvable:$true] %s239
          %245 = dma.hbm_to_vmem [thread:$0]  %s238, 2048, %s240, %s225, 128, 128, 8
        $region32: #{tpu_custom_call.1} parent=27 // pred_fallthru
          _
      $region28: #{tpu_custom_call.1} parent=5 // pred_fallthru
        _
      %p246 = scmp.le.s32.totalorder 1, %s14
      %p247 = scmp.lt.s32.totalorder %s14, 5
      %p248 = pnand %p246, %p247
      %p249 = pneg %p248
      // Predicated region
      $region33: #{tpu_custom_call.1} parent=5 // pred_check
        _
      $region34: #{tpu_custom_call.1} parent=5 // pred_check_branch
        %251 = sbr.rel (%p248) target = $region36
      $region35: #{tpu_custom_call.1} parent=5 // pred_region
        %s252 = ssub.s32 %s14, 1
        %s253 = sand.u32 %s111, 1
        %s254 = scalar_lea.sflag [#allocation3], %s253
        %s255 = sand.u32 %s111, 1
        %s256 = smul.addr %s255, 128
        %s257 = scalar_lea.vmem [#allocation2], %s256
        // Predicated region
        $region37: #{tpu_custom_call.1} parent=35 // pred_check
          %p258 = pneg %p124
        $region38: #{tpu_custom_call.1} parent=35 // pred_check_branch
          %260 = sbr.rel (%p258) target = $region40
        $region39: #{tpu_custom_call.1} parent=35 // pred_region
          %262 = dma.done %s254, 2048
        $region40: #{tpu_custom_call.1} parent=35 // pred_fallthru
          _
        %p263 = scmp.lt.s32.totalorder %s25, 0
        %s264 = scalar_select %p263, %s25, 0
        %p265 = scmp.lt.s32.totalorder %s28, 0
        %s266 = scalar_select %p265, %s28, 0
        %s267 = sadd.s32 %s266, %s264
        %s268 = smul.addr %s267, 8
        %s269 = scalar_lea.vmem %s0, %s268
        %p270 = pneg %p68
        %p271 = pneg %p65
        %p272 = scmp.lt.s32.totalorder %s25, 0
        %s273 = scalar_select %p272, %s25, 0
        %s274 = smul.addr %s273, 8
        %s275 = scalar_lea.vmem %s1, %s274
        %p276 = pneg %p94
        %p277 = pneg %p91
        %s278 = sand.u32 %s111, 1
        %s279 = scalar_lea.sflag [#allocation3], %s278
        %s280 = sand.u32 %s111, 1
        %s281 = smul.addr %s280, 128
        %s282 = scalar_lea.vmem [#allocation2], %s281
        %p283 = pneg %p124
        %p284 = pneg %p121
        %p285 = scmp.lt.s32.totalorder %s26, 0
        %s286 = scalar_select %p285, %s26, 0
        %s287 = smul.addr %s286, 4
        %s288 = scalar_lea.vmem %s3, %s287
        %p289 = pneg %p150
        %p290 = pneg %p147
        %p291 = pneg %p178
        %p292 = pneg %p175
        %p293 = scmp.lt.s32.totalorder %s25, 0
        %s294 = scalar_select %p293, %s25, 0
        %p295 = scmp.lt.s32.totalorder %s28, 0
        %s296 = scalar_select %p295, %s28, 0
        %s297 = sadd.s32 %s296, %s294
        %s298 = smul.addr %s297, 8
        %s299 = scalar_lea.vmem %s0, %s298
        %p300 = scmp.lt.s32.totalorder %s25, 0
        %s301 = scalar_select %p300, %s25, 0
        %s302 = smul.addr %s301, 8
        %s303 = scalar_lea.vmem %s1, %s302
        %s304 = smul.u32 16, %s28
        %p305 = scmp.lt.s32.totalorder %s26, 0
        %s306 = scalar_select %p305, %s26, 0
        %s307 = smul.addr %s306, 4
        %s308 = scalar_lea.vmem %s3, %s307
        %p309 = scmp.eq.s32.totalorder %s27, 0
        %p310 = scmp.eq.s32.totalorder %s28, 0
        %p311 = pnand %p309, %p310
        %p312 = pneg %p311
        // Predicated region
        $region41: #{tpu_custom_call.1} parent=35 // pred_check
          _
        $region42: #{tpu_custom_call.1} parent=35 // pred_check_branch
          %314 = sbr.rel (%p311) target = $region44
        $region43: #{tpu_custom_call.1} parent=35 // pred_region
          %v315 = vld [vmem:[%s303] sm:$0xff]
          %v316 = vld [vmem:[%s308] sm:$0xf]
          %vm317 = vcmask 31744
          %v319 = vsel %vm317, %v315, 0
          %vm321 = vcmask 1043456
          %v323 = vsel %vm321, %v316, 0
          %325 = vmatpush.msra.mxu0 0.0
          %326 = vmatpush.msra.mxu0 0.0
          %327 = vmatpush.msra.mxu0 0.0
          %328 = vmatpush.msra.mxu0 0.0
          %329 = vmatpush.msra.mxu0 0.0
          %330 = vmatpush.msra.mxu0 0.0
          %331 = vmatpush.msra.mxu0 0.0
          %332 = vmatpush.msra.mxu0 0.0
          %333 = vmatpush.msra.mxu0 0.0
          %334 = vmatpush.msra.mxu0 0.0
          %335 = vmatpush.msra.mxu0 0.0
          %336 = vmatpush.msra.mxu0 0.0
          %337 = vmatpush.msra.mxu0 0.0
          %338 = vmatpush.msra.mxu0 0.0
          %339 = vmatpush.msra.mxu0 0.0
          %340 = vmatpush.msra.mxu0 %v323
          %341 = vmatmul.f32.gmra.mxu0 %v319
          %v342 = vpop.f32.mrf.mxu0
          %v343 = vadd.f32 0.0, %v342
          %344 = vdwg.mxu0
          %345 = vst [vmem:[#allocation5] sm:$0xff] %v343
        $region44: #{tpu_custom_call.1} parent=35 // pred_fallthru
          _
        %v346 = vlaneseq
        %v347 = vand.u32 %v346, 127
        %v348 = vstv %s27
        %vm349 = vcmp.eq.s32.totalorder %v347, %v348
        %v350 = vld [vmem:[%s303] sm:$0xff]
        %v351 = vsel %vm349, %v350, 0.0
        %vm352 = vcmask 31744
        %v353 = vsel %vm352, %v351, 0.0
        %354 = vadd.xlane.f32.xlu0 %v353
        %v355 = vpop.xlane.xlu0 %354
        %v356 = vld [vmem:[#allocation5] sm:$0xff]
        %v357 = vld [vmem:[%s299] sm:$0xff]
        %v358 = vmul.f32 %v355, %v357
        %v359 = vld [vmem:[%s257] sm:$0xff]
        %v360 = vld [vmem:[%s257 + $0x8] sm:$0xff]
        %v361 = vld [vmem:[%s257 + $0x10] sm:$0xff]
        %v362 = vld [vmem:[%s257 + $0x18] sm:$0xff]
        %v363 = vld [vmem:[%s257 + $0x20] sm:$0xff]
        %v364 = vld [vmem:[%s257 + $0x28] sm:$0xff]
        %v365 = vld [vmem:[%s257 + $0x30] sm:$0xff]
        %v366 = vld [vmem:[%s257 + $0x38] sm:$0xff]
        %v367 = vld [vmem:[%s257 + $0x40] sm:$0xff]
        %v368 = vld [vmem:[%s257 + $0x48] sm:$0xff]
        %v369 = vld [vmem:[%s257 + $0x50] sm:$0xff]
        %v370 = vld [vmem:[%s257 + $0x58] sm:$0xff]
        %v371 = vld [vmem:[%s257 + $0x60] sm:$0xff]
        %v372 = vld [vmem:[%s257 + $0x68] sm:$0xff]
        %v373 = vld [vmem:[%s257 + $0x70] sm:$0xff]
        %v374 = vld [vmem:[%s257 + $0x78] sm:$0xff]
        %375 = vmatpush.msra.mxu0 %v374
        %376 = vmatpush.msra.mxu0 %v373
        %377 = vmatpush.msra.mxu0 %v372
        %378 = vmatpush.msra.mxu0 %v371
        %379 = vmatpush.msra.mxu0 %v370
        %380 = vmatpush.msra.mxu0 %v369
        %381 = vmatpush.msra.mxu0 %v368
        %382 = vmatpush.msra.mxu0 %v367
        %383 = vmatpush.msra.mxu0 %v366
        %384 = vmatpush.msra.mxu0 %v365
        %385 = vmatpush.msra.mxu0 %v364
        %386 = vmatpush.msra.mxu0 %v363
        %387 = vmatpush.msra.mxu0 %v362
        %388 = vmatpush.msra.mxu0 %v361
        %389 = vmatpush.msra.mxu0 %v360
        %390 = vmatpush.msra.mxu0 %v359
        %391 = vmatmul.f32.gmra.mxu0 %v358
        %v392 = vpop.f32.mrf.mxu0
        %v393 = vadd.f32 0.0, %v392
        %394 = vdwg.mxu0
        %v395 = vadd.f32 %v356, %v393
        %396 = vst [vmem:[#allocation5] sm:$0xff] %v395
        // Predicated region
        $region45: #{tpu_custom_call.1} parent=35 // pred_check
          %p397 = pneg %p175
        $region46: #{tpu_custom_call.1} parent=35 // pred_check_branch
          %399 = sbr.rel (%p397) target = $region48
        $region47: #{tpu_custom_call.1} parent=35 // pred_region
          %401 = vsyncadd [#allocation4], 0
          %s402 = sadd.s32 %s26, %s25
          %s403 = smul.addr %s402, 8
          %s404 = scalar_lea.hbm %s4, %s403
          %s406 = sshll.u32 [#allocation5], 4
          %s407 = int_to_ptr.vmem [resolvable:$true] %s406
          %s408 = sshll.u32 %s404, 4
          %s409 = int_to_ptr.hbm [resolvable:$true] %s408
          %411 = dma.vmem_to_hbm [thread:$0]  %s407, 128, %s409, [#allocation4]
        $region48: #{tpu_custom_call.1} parent=35 // pred_fallthru
          _
        // Predicated region
        $region49: #{tpu_custom_call.1} parent=35 // pred_check
          %p412 = pneg %p175
        $region50: #{tpu_custom_call.1} parent=35 // pred_check_branch
          %414 = sbr.rel (%p412) target = $region52
        $region51: #{tpu_custom_call.1} parent=35 // pred_region
          %416 = dma.done [#allocation4], 128
        $region52: #{tpu_custom_call.1} parent=35 // pred_fallthru
          _
      $region36: #{tpu_custom_call.1} parent=5 // pred_fallthru
        _
      %p417 = scmp.le.s32.totalorder 2, %s14
      // Predicated region
      $region53: #{tpu_custom_call.1} parent=5 // pred_check
        %p418 = pneg %p417
      $region54: #{tpu_custom_call.1} parent=5 // pred_check_branch
        %420 = sbr.rel (%p418) target = $region56
      $region55: #{tpu_custom_call.1} parent=5 // pred_region
        %s421 = ssub.s32 %s14, 2
      $region56: #{tpu_custom_call.1} parent=5 // pred_fallthru
        _
    $region6: #{tpu_custom_call.1} parent=1 // loop_footer
      %s18 = sadd.s32 1, %s14
    $region7: #{tpu_custom_call.1} parent=1 // loop_footer_branch
      %13 = sbr.rel target = $region3
    $region8: #{tpu_custom_call.1} parent=1 // loop_exit
      _
    %422 = vsyncpa [#allocation3], 1
    %s423 = scalar_lea.sflag [#allocation3], 1
    %424 = vsyncpa %s423, 1
    %425 = vsyncpa [#allocation4], 1
    %s426 = scalar_lea.sflag [#allocation4], 1
    %427 = vsyncpa %s426, 1

</llo_original>
